<compile_context>
chip_gen: v7x
topology: tpu7x:2x2x1
jax: 0.10.0
libtpu: 0.0.40
codegen_flags: <defaults>
</compile_context>

<pallas_src>
import jax
import jax.numpy as jnp
from jax import lax
from jax.experimental import pallas as pl
from jax.experimental.pallas import tpu as pltpu


def _gram_kernel(w_ref, pi_ref, out_ref, acc_ref):
    # w_ref  : (p_pad, tm)         W tile for this m-chunk
    # pi_ref : (kp1, tm)           memberships for this chunk; last row is all-ones
    # out_ref: (kp1*p_pad, p_pad)  stacked Grams [G_0; ...; G_{k-1}; G_all]
    # acc_ref: (kp1*p_pad, p_pad)  f32 accumulator (persists across the m axis)
    j = pl.program_id(0)

    @pl.when(j == 0)
    def _():
        acc_ref[...] = jnp.zeros_like(acc_ref)

    w = w_ref[...]                     # (p_pad, tm)
    pi = pi_ref[...]                   # (kp1, tm)
    kp1 = pi.shape[0]

    # Stack the class-masked copies of W along the MXU M dimension so all k
    # per-class Grams plus the global Gram come out of one big matmul
    # (keeps the MXU busy even when p is small).
    lhs = jnp.concatenate([pi[c:c + 1, :] * w for c in range(kp1)], axis=0)

    # Contract over the shared sample axis directly — no W.T materialization.
    acc_ref[...] += lax.dot_general(
        lhs, w,
        dimension_numbers=(((1,), (1,)), ((), ())),
        preferred_element_type=jnp.float32,
    )

    @pl.when(j == pl.num_programs(0) - 1)
    def _():
        out_ref[...] = acc_ref[...]


def _mcr2_grams(W_pad, Pi_pad, *, tm):
    """Pallas call: stacked Grams  [(W*Pi_0)W^T; ...; (W*Pi_{k-1})W^T; W W^T]."""
    p_pad, m_pad = W_pad.shape
    kp1 = Pi_pad.shape[0]
    n_chunks = m_pad // tm

    itemsize = jnp.dtype(W_pad.dtype).itemsize
    est = (2 * (p_pad + kp1) * tm * itemsize   # double-buffered input tiles
           + 3 * kp1 * p_pad * p_pad * 4)      # accumulator + output buffers
    vmem_limit = int(min(56 * 2 ** 20, max(32 * 2 ** 20, 2 * est)))

    return pl.pallas_call(
        _gram_kernel,
        out_shape=jax.ShapeDtypeStruct((kp1 * p_pad, p_pad), jnp.float32),
        grid_spec=pltpu.PrefetchScalarGridSpec(
            num_scalar_prefetch=0,
            grid=(n_chunks,),
            in_specs=[
                pl.BlockSpec((p_pad, tm), lambda j: (0, j)),
                pl.BlockSpec((kp1, tm), lambda j: (0, j)),
            ],
            out_specs=pl.BlockSpec((kp1 * p_pad, p_pad), lambda j: (0, 0)),
            scratch_shapes=[pltpu.VMEM((kp1 * p_pad, p_pad), jnp.float32)],
        ),
        compiler_params=pltpu.CompilerParams(
            dimension_semantics=("arbitrary",),   # m is a reduction axis
            vmem_limit_bytes=vmem_limit,
        ),
    )(W_pad, Pi_pad)


def _round_up(x, mult):
    return ((x + mult - 1) // mult) * mult


def _choose_tm(m, p_pad, itemsize):
    # Keep each W input buffer <= ~8 MiB so double-buffering fits comfortably
    # under the scoped-VMEM limit on every TPU generation (incl. v7x's 64 MiB).
    tm = (8 * 2 ** 20) // max(1, p_pad * itemsize)
    tm = max(128, (tm // 128) * 128)
    return min(tm, _round_up(m, 128))


def mcr2_forward(X, Y, num_classes=None, eps=0.01, gamma=1.0,
                 compute_dtype=jnp.float32, tm=None):
    """Reproduces MaximalCodingRateReduction.forward -> (discrimn_loss, compress_loss).

    Pass `num_classes` statically when Y holds integer labels and this function
    is jitted (int(Y.max()) requires a concrete value).
    """
    X = X.astype(jnp.float32)
    m, p = X.shape

    if Y.ndim == 1:
        if num_classes is None:
            num_classes = int(Y.max()) + 1    # only valid for concrete (non-traced) Y
        Pi = jax.nn.one_hot(Y, num_classes, dtype=jnp.float32).T        # (k, m)
    else:
        if num_classes is None:
            num_classes = Y.shape[1]
        Pi = Y.astype(jnp.float32).T                                    # (k, m)

    W = X.T                                                             # (p, m)

    # ---- padding / tiling (static Python ints) ----
    p_pad = _round_up(p, 8)
    itemsize = jnp.dtype(compute_dtype).itemsize
    if tm is None:
        tm = _choose_tm(m, p_pad, itemsize)
    m_pad = _round_up(m, tm)
    kp1 = num_classes + 1   # extra all-ones "class" row yields the global Gram W W^T

    W_pad = jnp.pad(W, ((0, p_pad - p), (0, m_pad - m))).astype(compute_dtype)
    Pi_ext = jnp.concatenate([Pi, jnp.ones((1, m), jnp.float32)], axis=0)
    Pi_pad = jnp.pad(Pi_ext, ((0, 0), (0, m_pad - m))).astype(compute_dtype)

    grams = _mcr2_grams(W_pad, Pi_pad, tm=tm)                  # (kp1*p_pad, p_pad) f32
    grams = grams.reshape(kp1, p_pad, p_pad)[:, :p, :p]        # (kp1, p, p)
    gram_cls, gram_all = grams[:num_classes], grams[num_classes]

    eye = jnp.eye(p, dtype=jnp.float32)

    # ---- discriminative loss: logdet(I + p/(m*eps) * W W^T) / 2 ----
    # TODO(synk): logdet (LU/Cholesky factorization) has no clean Pallas equivalent;
    # computed with jnp.linalg.slogdet on the Pallas-produced (p, p) Grams.
    scalar = p / (m * eps)
    discrimn_loss = jnp.linalg.slogdet(eye + scalar * gram_all)[1] / 2.0

    # ---- compressive loss ----
    trPi = Pi.sum(1) + 1e-08                                   # (k,)
    scale = (p / (trPi * eps)).reshape(num_classes, 1, 1)
    log_det = jnp.linalg.slogdet(eye[None] + scale * gram_cls)[1]
    compress_loss = (trPi * log_det / (2 * m)).sum()

    return discrimn_loss, compress_loss


def _mcr2_reference(X, Y, num_classes, eps=0.01):
    """Pure-jnp reference (no Pallas) for correctness checks."""
    X = X.astype(jnp.float32)
    m, p = X.shape
    Pi = jax.nn.one_hot(Y, num_classes, dtype=jnp.float32).T.reshape(num_classes, 1, m)
    W = X.T
    eye = jnp.eye(p, dtype=jnp.float32)
    discrimn = jnp.linalg.slogdet(eye + (p / (m * eps)) * W @ W.T)[1] / 2.0
    trPi = Pi.sum(2) + 1e-08
    scale = (p / (trPi * eps)).reshape(num_classes, 1, 1)
    gram_cls = (W[None] * Pi) @ jnp.swapaxes(W[None], 1, 2)
    log_det = jnp.linalg.slogdet(eye[None] + scale * gram_cls)[1]
    compress = (jnp.squeeze(trPi) * log_det / (2 * m)).sum()
    return discrimn, compress


if __name__ == "__main__":
    key = jax.random.PRNGKey(0)

    # --- case 1: small shapes consistent with the module (m=64 samples, p=32 feats) ---
    kx, ky = jax.random.split(key)
    m, p, k = 64, 32, 4
    X = jax.random.normal(kx, (m, p), dtype=jnp.float32)
    Y = jax.random.randint(ky, (m,), 0, k)

    d_loss, c_loss = mcr2_forward(X, Y, num_classes=k)
    jax.block_until_ready((d_loss, c_loss))
    d_ref, c_ref = _mcr2_reference(X, Y, k)
    assert jnp.allclose(d_loss, d_ref, rtol=1e-4, atol=1e-4)
    assert jnp.allclose(c_loss, c_ref, rtol=1e-4, atol=1e-4)

    # --- case 2: unaligned p + multi-chunk m reduction (exercises accumulation/padding) ---
    kx2, ky2 = jax.random.split(ky)
    m2, p2, k2 = 512, 20, 3
    X2 = jax.random.normal(kx2, (m2, p2), dtype=jnp.float32)
    Y2 = jax.random.randint(ky2, (m2,), 0, k2)
    d2, c2 = mcr2_forward(X2, Y2, num_classes=k2, tm=128)   # grid of 4 m-chunks
    jax.block_until_ready((d2, c2))
    d2r, c2r = _mcr2_reference(X2, Y2, k2)
    assert jnp.allclose(d2, d2r, rtol=1e-4, atol=1e-4)
    assert jnp.allclose(c2, c2r, rtol=1e-4, atol=1e-4)

    # --- case 3: bf16 MXU inputs (f32 accumulation), loose tolerance sanity check ---
    d3, c3 = mcr2_forward(X, Y, num_classes=k, compute_dtype=jnp.bfloat16)
    jax.block_until_ready((d3, c3))
    assert jnp.allclose(d3, d_ref, rtol=1e-1, atol=1e-1)
    assert jnp.allclose(c3, c_ref, rtol=1e-1, atol=1e-1)

    print("KERNEL_OK")
</pallas_src>

<mosaic_0001>
module attributes {stable_mosaic.version = 11 : i64} {
  func.func @_gram_kernel(%arg0: i32, %arg1: memref<32x128xf32, #tpu.memory_space<vmem>>, %arg2: memref<5x128xf32, #tpu.memory_space<vmem>>, %arg3: memref<160x32xf32, #tpu.memory_space<vmem>>, %arg4: memref<160x32xf32, #tpu.memory_space<vmem>>) attributes {dimension_semantics = [#tpu.dimension_semantics<arbitrary>], iteration_bounds = array<i64: 1>, scalar_prefetch = 0 : i64, scratch_operands = 1 : i64, tpu.core_type = #tpu.core_type<tc>, window_params = [{transform_indices = @transform_0, window_bounds = array<i64: 32, 128>}, {transform_indices = @transform_1, window_bounds = array<i64: 5, 128>}, {pipeline_mode = #tpu.pipeline_mode<synchronous>, transform_indices = @transform_2, window_bounds = array<i64: 160, 32>}]} {
    %c0_i32 = arith.constant 0 : i32
    %0 = arith.cmpi eq, %arg0, %c0_i32 : i32
    %1 = arith.extui %0 : i1 to i32
    %c0_i32_0 = arith.constant 0 : i32
    %2 = arith.cmpi ne, %1, %c0_i32_0 : i32
    scf.if %2 {
      %cst_10 = arith.constant 0.000000e+00 : f32
      %28 = vector.broadcast %cst_10 : f32 to vector<160x32xf32>
      %c0_11 = arith.constant 0 : index
      %c0_12 = arith.constant 0 : index
      %29 = vector.load %arg4[%c0_11, %c0_12] : memref<160x32xf32, #tpu.memory_space<vmem>>, vector<160x32xf32>
      tpu.vector_store %arg4[%c0_11, %c0_12], %28 {strides = array<i32>} : memref<160x32xf32, #tpu.memory_space<vmem>>, vector<160x32xf32>,
    } else {
    }
    %c0 = arith.constant 0 : index
    %c0_1 = arith.constant 0 : index
    %3 = vector.load %arg1[%c0, %c0_1] : memref<32x128xf32, #tpu.memory_space<vmem>>, vector<32x128xf32>
    %c0_2 = arith.constant 0 : index
    %c0_3 = arith.constant 0 : index
    %4 = vector.load %arg2[%c0_2, %c0_3] : memref<5x128xf32, #tpu.memory_space<vmem>>, vector<5x128xf32>
    %5 = vector.extract_strided_slice %4 {offsets = [0, 0], sizes = [1, 128], strides = [1, 1]} : vector<5x128xf32> to vector<1x128xf32>
    %6 = vector.broadcast %5 : vector<1x128xf32> to vector<32x128xf32>
    %7 = arith.mulf %6, %3 : vector<32x128xf32>
    %8 = vector.extract_strided_slice %4 {offsets = [1, 0], sizes = [1, 128], strides = [1, 1]} : vector<5x128xf32> to vector<1x128xf32>
    %9 = vector.broadcast %8 : vector<1x128xf32> to vector<32x128xf32>
    %10 = arith.mulf %9, %3 : vector<32x128xf32>
    %11 = vector.extract_strided_slice %4 {offsets = [2, 0], sizes = [1, 128], strides = [1, 1]} : vector<5x128xf32> to vector<1x128xf32>
    %12 = vector.broadcast %11 : vector<1x128xf32> to vector<32x128xf32>
    %13 = arith.mulf %12, %3 : vector<32x128xf32>
    %14 = vector.extract_strided_slice %4 {offsets = [3, 0], sizes = [1, 128], strides = [1, 1]} : vector<5x128xf32> to vector<1x128xf32>
    %15 = vector.broadcast %14 : vector<1x128xf32> to vector<32x128xf32>
    %16 = arith.mulf %15, %3 : vector<32x128xf32>
    %17 = vector.extract_strided_slice %4 {offsets = [4, 0], sizes = [1, 128], strides = [1, 1]} : vector<5x128xf32> to vector<1x128xf32>
    %18 = vector.broadcast %17 : vector<1x128xf32> to vector<32x128xf32>
    %19 = arith.mulf %18, %3 : vector<32x128xf32>
    %20 = tpu.concatenate %7, %10, %13, %16, %19 in 0 : vector<32x128xf32>, vector<32x128xf32>, vector<32x128xf32>, vector<32x128xf32>, vector<32x128xf32> -> vector<160x128xf32>
    %c0_4 = arith.constant 0 : index
    %c0_5 = arith.constant 0 : index
    %21 = vector.load %arg4[%c0_4, %c0_5] : memref<160x32xf32, #tpu.memory_space<vmem>>, vector<160x32xf32>
    %cst = arith.constant dense<0.000000e+00> : vector<160x32xf32>
    %22 = tpu.matmul %20, %3, %cst {dimension_numbers = #tpu.dot_dimension_numbers<[1], [1], [0], [0], [0, 0, 1, 0], [], []>} : vector<160x128xf32>, vector<32x128xf32>, vector<160x32xf32> -> vector<160x32xf32>
    %23 = arith.addf %21, %22 : vector<160x32xf32>
    %c0_6 = arith.constant 0 : index
    %c0_7 = arith.constant 0 : index
    %24 = vector.load %arg4[%c0_6, %c0_7] : memref<160x32xf32, #tpu.memory_space<vmem>>, vector<160x32xf32>
    tpu.vector_store %arg4[%c0_6, %c0_7], %23 {strides = array<i32>} : memref<160x32xf32, #tpu.memory_space<vmem>>, vector<160x32xf32>,
    %c0_i32_8 = arith.constant 0 : i32
    %25 = arith.cmpi eq, %arg0, %c0_i32_8 : i32
    %26 = arith.extui %25 : i1 to i32
    %c0_i32_9 = arith.constant 0 : i32
    %27 = arith.cmpi ne, %26, %c0_i32_9 : i32
    scf.if %27 {
      %c0_10 = arith.constant 0 : index
      %c0_11 = arith.constant 0 : index
      %28 = vector.load %arg4[%c0_10, %c0_11] : memref<160x32xf32, #tpu.memory_space<vmem>>, vector<160x32xf32>
      %c0_12 = arith.constant 0 : index
      %c0_13 = arith.constant 0 : index
      %29 = vector.load %arg3[%c0_12, %c0_13] : memref<160x32xf32, #tpu.memory_space<vmem>>, vector<160x32xf32>
      tpu.vector_store %arg3[%c0_12, %c0_13], %28 {strides = array<i32>} : memref<160x32xf32, #tpu.memory_space<vmem>>, vector<160x32xf32>,
    } else {
    }
    return
  }
  func.func @transform_0(%arg0: i32) -> (i32, i32) {
    %c0_i32 = arith.constant 0 : i32
    %c0_i32_0 = arith.constant 0 : i32
    return %c0_i32, %arg0 : i32, i32
  }
  func.func @transform_1(%arg0: i32) -> (i32, i32) {
    %c0_i32 = arith.constant 0 : i32
    %c0_i32_0 = arith.constant 0 : i32
    return %c0_i32, %arg0 : i32, i32
  }
  func.func @transform_2(%arg0: i32) -> (i32, i32) {
    %c0_i32 = arith.constant 0 : i32
    %c0_i32_0 = arith.constant 0 : i32
    %c0_i32_1 = arith.constant 0 : i32
    return %c0_i32, %c0_i32_0 : i32, i32
  }
}

</mosaic_0001>

<llo_original>
// kernel: tpu_custom_call.1
$region0: #{tpu_custom_call.1}
  #allocation0 [shape = 'u32[]', space=smem, size = 0x4, offset = 0x4, fixed_abs, tag = 'smem constant byte address 0x4 - core index']
  #allocation1 [shape = 'u32[144,128]{1,0:T(1,128)}', space=vmem, size = 0x12000, scoped, tag = 'internal scratch']
  #allocation2 [shape = 'f32[160,32]{1,0:T(8,128)}', space=vmem, size = 0x14000, scoped, tag = 'scratch operand']
  %s0 = inlined_call_operand.hbm [shape: f32[32,128], index: 0, kind: input, shape index: {}]
  %s1 = inlined_call_operand.hbm [shape: f32[5,128], index: 1, kind: input, shape index: {}]
  %s2 = inlined_call_operand.vmem [shape: f32[160,32], index: 2, kind: output, shape index: {}]
  %s3 = sld [smem:[#allocation0]]
  $region34: #{tpu_custom_call.1} parent=0
    _
  %s5 = ssub.s32 1, %s3
  %s6 = scalar_select 0, %s5, %s3
  $region1: #{tpu_custom_call.1} parent=0
    #allocation3 [shape = 'u8[16384]{0}', space=vmem, size = 0x4000, scoped, tag = 'input window, operand 0, single buffered']
    #allocation4 [shape = 's32[1]{0}', space=sflag, size = 0x4, scoped, tag = 'scoped memory for tpu_custom_call.1']
    #allocation5 [shape = 'u8[4096]{0}', space=vmem, size = 0x1000, scoped, tag = 'input window, operand 1, single buffered']
    #allocation6 [shape = 's32[1]{0}', space=sflag, size = 0x4, scoped, tag = 'scoped memory for tpu_custom_call.1']
    %7 = vsyncpa [#allocation4], 0
    %8 = vsyncpa [#allocation6], 0
    // Predicated region
    $region2: #{tpu_custom_call.1} parent=1 // pred_check
      _
    $region3: #{tpu_custom_call.1} parent=1 // pred_check_branch
      %10 = sbr.rel (0) target = $region5
    $region4: #{tpu_custom_call.1} parent=1 // pred_region
      %s12 = ssub.s32 512, 512
      %13 = vsyncadd [#allocation4], %s12
      %s14 = sshll.u32 [#allocation3], 4
      %s15 = int_to_ptr.vmem [resolvable:$true] %s14
      %20 = dma.hbm_to_vmem [thread:$0]  %s0, 512, %s15, [#allocation4], 128, 128, 8
    $region5: #{tpu_custom_call.1} parent=1 // pred_fallthru
      _
    // Predicated region
    $region6: #{tpu_custom_call.1} parent=1 // pred_check
      _
    $region7: #{tpu_custom_call.1} parent=1 // pred_check_branch
      %22 = sbr.rel (0) target = $region9
    $region8: #{tpu_custom_call.1} parent=1 // pred_region
      %s24 = ssub.s32 128, 128
      %25 = vsyncadd [#allocation6], %s24
      %s27 = sshll.u32 [#allocation5], 4
      %s28 = int_to_ptr.vmem [resolvable:$true] %s27
      %30 = dma.hbm_to_vmem [thread:$0]  %s1, 128, %s28, [#allocation6]
    $region9: #{tpu_custom_call.1} parent=1 // pred_fallthru
      _
    // Predicated region
    $region10: #{tpu_custom_call.1} parent=1 // pred_check
      _
    $region11: #{tpu_custom_call.1} parent=1 // pred_check_branch
      %32 = sbr.rel (0) target = $region13
    $region12: #{tpu_custom_call.1} parent=1 // pred_region
      %33 = dma.done [#allocation4], 512
    $region13: #{tpu_custom_call.1} parent=1 // pred_fallthru
      _
    // Predicated region
    $region14: #{tpu_custom_call.1} parent=1 // pred_check
      _
    $region15: #{tpu_custom_call.1} parent=1 // pred_check_branch
      %35 = sbr.rel (0) target = $region17
    $region16: #{tpu_custom_call.1} parent=1 // pred_region
      %36 = dma.done [#allocation6], 128
    $region17: #{tpu_custom_call.1} parent=1 // pred_fallthru
      _
    %p37 = scmp.eq.s32.totalorder 0, 0
    // Predicated region
    $region18: #{tpu_custom_call.1} parent=1 // pred_check
      %p38 = pneg %p37
    $region19: #{tpu_custom_call.1} parent=1 // pred_check_branch
      %40 = sbr.rel (%p38) target = $region21
    $region20: #{tpu_custom_call.1} parent=1 // pred_region
      %vm41 = vcmask 261120
      %42 = vst.msk [vmem:[#allocation2] sm:$0xff] %vm41, 0.0
      %43 = vst.msk [vmem:[#allocation2 + $0x8] sm:$0xff] %vm41, 0.0
      %44 = vst.msk [vmem:[#allocation2 + $0x10] sm:$0xff] %vm41, 0.0
      %45 = vst.msk [vmem:[#allocation2 + $0x18] sm:$0xff] %vm41, 0.0
      %46 = vst.msk [vmem:[#allocation2 + $0x20] sm:$0xff] %vm41, 0.0
      %47 = vst.msk [vmem:[#allocation2 + $0x28] sm:$0xff] %vm41, 0.0
      %48 = vst.msk [vmem:[#allocation2 + $0x30] sm:$0xff] %vm41, 0.0
      %49 = vst.msk [vmem:[#allocation2 + $0x38] sm:$0xff] %vm41, 0.0
      %50 = vst.msk [vmem:[#allocation2 + $0x40] sm:$0xff] %vm41, 0.0
      %51 = vst.msk [vmem:[#allocation2 + $0x48] sm:$0xff] %vm41, 0.0
      %52 = vst.msk [vmem:[#allocation2 + $0x50] sm:$0xff] %vm41, 0.0
      %53 = vst.msk [vmem:[#allocation2 + $0x58] sm:$0xff] %vm41, 0.0
      %54 = vst.msk [vmem:[#allocation2 + $0x60] sm:$0xff] %vm41, 0.0
      %55 = vst.msk [vmem:[#allocation2 + $0x68] sm:$0xff] %vm41, 0.0
      %56 = vst.msk [vmem:[#allocation2 + $0x70] sm:$0xff] %vm41, 0.0
      %57 = vst.msk [vmem:[#allocation2 + $0x78] sm:$0xff] %vm41, 0.0
      %58 = vst.msk [vmem:[#allocation2 + $0x80] sm:$0xff] %vm41, 0.0
      %59 = vst.msk [vmem:[#allocation2 + $0x88] sm:$0xff] %vm41, 0.0
      %60 = vst.msk [vmem:[#allocation2 + $0x90] sm:$0xff] %vm41, 0.0
      %61 = vst.msk [vmem:[#allocation2 + $0x98] sm:$0xff] %vm41, 0.0
    $region21: #{tpu_custom_call.1} parent=1 // pred_fallthru
      _
    %v62 = vld [vmem:[#allocation3] sm:$0xff]
    %v63 = vld [vmem:[#allocation3 + $0x8] sm:$0xff]
    %v64 = vld [vmem:[#allocation3 + $0x10] sm:$0xff]
    %v65 = vld [vmem:[#allocation3 + $0x18] sm:$0xff]
    %v66 = vld [vmem:[#allocation5] sm:$0x1f]
    %v67 = vlaneseq
    %v68 = vshrl.u32 %v67, 7
    %v69 = vsub.s32 0, %v68
    %v70 = vrot.slane %v66, %v69
    %v71 = vmul.f32 %v70, %v62
    %v72 = vmul.f32 %v70, %v63
    %v73 = vmul.f32 %v70, %v64
    %v74 = vmul.f32 %v70, %v65
    %v75 = vlaneseq
    %v76 = vshrl.u32 %v75, 7
    %v77 = vsub.s32 1, %v76
    %v78 = vrot.slane %v66, %v77
    %v79 = vmul.f32 %v78, %v62
    %v80 = vmul.f32 %v78, %v63
    %v81 = vmul.f32 %v78, %v64
    %v82 = vmul.f32 %v78, %v65
    %v83 = vlaneseq
    %v84 = vshrl.u32 %v83, 7
    %v85 = vsub.s32 2, %v84
    %v86 = vrot.slane %v66, %v85
    %v87 = vmul.f32 %v86, %v62
    %v88 = vmul.f32 %v86, %v63
    %v89 = vmul.f32 %v86, %v64
    %v90 = vmul.f32 %v86, %v65
    %v91 = vlaneseq
    %v92 = vshrl.u32 %v91, 7
    %v93 = vsub.s32 3, %v92
    %v94 = vrot.slane %v66, %v93
    %v95 = vmul.f32 %v94, %v62
    %v96 = vmul.f32 %v94, %v63
    %v97 = vmul.f32 %v94, %v64
    %v98 = vmul.f32 %v94, %v65
    %v99 = vlaneseq
    %v100 = vshrl.u32 %v99, 7
    %v101 = vsub.s32 4, %v100
    %v102 = vrot.slane %v66, %v101
    %v103 = vmul.f32 %v102, %v62
    %v104 = vmul.f32 %v102, %v63
    %v105 = vmul.f32 %v102, %v64
    %v106 = vmul.f32 %v102, %v65
    %v107 = vld [vmem:[#allocation2] sm:$0xff]
    %v108 = vld [vmem:[#allocation2 + $0x8] sm:$0xff]
    %v109 = vld [vmem:[#allocation2 + $0x10] sm:$0xff]
    %v110 = vld [vmem:[#allocation2 + $0x18] sm:$0xff]
    %v111 = vld [vmem:[#allocation2 + $0x20] sm:$0xff]
    %v112 = vld [vmem:[#allocation2 + $0x28] sm:$0xff]
    %v113 = vld [vmem:[#allocation2 + $0x30] sm:$0xff]
    %v114 = vld [vmem:[#allocation2 + $0x38] sm:$0xff]
    %v115 = vld [vmem:[#allocation2 + $0x40] sm:$0xff]
    %v116 = vld [vmem:[#allocation2 + $0x48] sm:$0xff]
    %v117 = vld [vmem:[#allocation2 + $0x50] sm:$0xff]
    %v118 = vld [vmem:[#allocation2 + $0x58] sm:$0xff]
    %v119 = vld [vmem:[#allocation2 + $0x60] sm:$0xff]
    %v120 = vld [vmem:[#allocation2 + $0x68] sm:$0xff]
    %v121 = vld [vmem:[#allocation2 + $0x70] sm:$0xff]
    %v122 = vld [vmem:[#allocation2 + $0x78] sm:$0xff]
    %v123 = vld [vmem:[#allocation2 + $0x80] sm:$0xff]
    %v124 = vld [vmem:[#allocation2 + $0x88] sm:$0xff]
    %v125 = vld [vmem:[#allocation2 + $0x90] sm:$0xff]
    %v126 = vld [vmem:[#allocation2 + $0x98] sm:$0xff]
    %127 = vmatprep.subr.mxu0 0.0
    %128 = vmatpush1.xpose.msra.mxu0 %v62
    %129 = vmatprep.subr.mxu0 0.0
    %130 = vmatpush1.xpose.msra.mxu0 %v63
    %131 = vmatprep.subr.mxu0 0.0
    %132 = vmatpush1.xpose.msra.mxu0 %v64
    %133 = vmatprep.subr.mxu0 0.0
    %134 = vmatpush1.xpose.msra.mxu0 %v65
    %135 = vmatprep.subr.mxu0 0.0
    %136 = vmatpush1.xpose.msra.mxu0 0.0
    %137 = vmatprep.subr.mxu0 0.0
    %138 = vmatpush1.xpose.msra.mxu0 0.0
    %139 = vmatprep.subr.mxu0 0.0
    %140 = vmatpush1.xpose.msra.mxu0 0.0
    %141 = vmatprep.subr.mxu0 0.0
    %142 = vmatpush1.xpose.msra.mxu0 0.0
    %143 = vmatprep.subr.mxu0 0.0
    %144 = vmatpush1.xpose.msra.mxu0 0.0
    %145 = vmatprep.subr.mxu0 0.0
    %146 = vmatpush1.xpose.msra.mxu0 0.0
    %147 = vmatprep.subr.mxu0 0.0
    %148 = vmatpush1.xpose.msra.mxu0 0.0
    %149 = vmatprep.subr.mxu0 0.0
    %150 = vmatpush1.xpose.msra.mxu0 0.0
    %151 = vmatprep.subr.mxu0 0.0
    %152 = vmatpush1.xpose.msra.mxu0 0.0
    %153 = vmatprep.subr.mxu0 0.0
    %154 = vmatpush1.xpose.msra.mxu0 0.0
    %155 = vmatprep.subr.mxu0 0.0
    %156 = vmatpush1.xpose.msra.mxu0 0.0
    %157 = vmatprep.subr.mxu0 0.0
    %158 = vmatpush1.xpose.msra.mxu0 0.0
    %159 = vmatprep.subr.mxu0 0.0
    %160 = vmatpush1.xpose.msra.mxu0 0.0
    %161 = vmatprep.subr.mxu0 0.0
    %162 = vmatpush1.xpose.msra.mxu0 0.0
    %163 = vmatprep.subr.mxu0 0.0
    %164 = vmatpush1.xpose.msra.mxu0 0.0
    %165 = vmatprep.subr.mxu0 0.0
    %166 = vmatpush1.xpose.msra.mxu0 0.0
    %167 = vmatprep.subr.mxu0 0.0
    %168 = vmatpush1.xpose.msra.mxu0 0.0
    %169 = vmatprep.subr.mxu0 0.0
    %170 = vmatpush1.xpose.msra.mxu0 0.0
    %171 = vmatprep.subr.mxu0 0.0
    %172 = vmatpush1.xpose.msra.mxu0 0.0
    %173 = vmatprep.subr.mxu0 0.0
    %174 = vmatpush1.xpose.msra.mxu0 0.0
    %175 = vmatprep.subr.mxu0 0.0
    %176 = vmatpush1.xpose.msra.mxu0 0.0
    %177 = vmatprep.subr.mxu0 0.0
    %178 = vmatpush1.xpose.msra.mxu0 0.0
    %179 = vmatprep.subr.mxu0 0.0
    %180 = vmatpush1.xpose.msra.mxu0 0.0
    %181 = vmatprep.subr.mxu0 0.0
    %182 = vmatpush1.xpose.msra.mxu0 0.0
    %183 = vmatprep.subr.mxu0 0.0
    %184 = vmatpush1.xpose.msra.mxu0 0.0
    %185 = vmatprep.subr.mxu0 0.0
    %186 = vmatpush1.xpose.msra.mxu0 0.0
    %187 = vmatprep.subr.mxu0 0.0
    %188 = vmatpush1.xpose.msra.mxu0 0.0
    %189 = vmatprep.subr.mxu0 0.0
    %190 = vmatpush1.xpose.msra.mxu0 0.0
    %191 = vmatprep.mubr.f32.mxu0 0.0
    %192 = vmatmul.mubr.f32.gmra.mrb[0].mxu0 %v71
    %v193 = vpop.f32.mrb[0].mxu0
    %v194 = vadd.f32 0.0, %v193
    %v195 = vpop.f32.mrb[0].mxu0
    %196 = vmatprep.mubr.f32.mxu0 0.0
    %197 = vmatmul.mubr.f32.gmra.mrb[0].mxu0 %v72
    %v198 = vpop.f32.mrb[0].mxu0
    %v199 = vadd.f32 0.0, %v198
    %v200 = vpop.f32.mrb[0].mxu0
    %201 = vmatprep.mubr.f32.mxu0 0.0
    %202 = vmatmul.mubr.f32.gmra.mrb[0].mxu0 %v73
    %v203 = vpop.f32.mrb[0].mxu0
    %v204 = vadd.f32 0.0, %v203
    %v205 = vpop.f32.mrb[0].mxu0
    %206 = vmatprep.mubr.f32.mxu0 0.0
    %207 = vmatmul.mubr.f32.gmra.mrb[0].mxu0 %v74
    %v208 = vpop.f32.mrb[0].mxu0
    %v209 = vadd.f32 0.0, %v208
    %v210 = vpop.f32.mrb[0].mxu0
    %211 = vmatprep.mubr.f32.mxu0 0.0
    %212 = vmatmul.mubr.f32.gmra.mrb[0].mxu0 %v79
    %v213 = vpop.f32.mrb[0].mxu0
    %v214 = vadd.f32 0.0, %v213
    %v215 = vpop.f32.mrb[0].mxu0
    %216 = vmatprep.mubr.f32.mxu0 0.0
    %217 = vmatmul.mubr.f32.gmra.mrb[0].mxu0 %v80
    %v218 = vpop.f32.mrb[0].mxu0
    %v219 = vadd.f32 0.0, %v218
    %v220 = vpop.f32.mrb[0].mxu0
    %221 = vmatprep.mubr.f32.mxu0 0.0
    %222 = vmatmul.mubr.f32.gmra.mrb[0].mxu0 %v81
    %v223 = vpop.f32.mrb[0].mxu0
    %v224 = vadd.f32 0.0, %v223
    %v225 = vpop.f32.mrb[0].mxu0
    %226 = vmatprep.mubr.f32.mxu0 0.0
    %227 = vmatmul.mubr.f32.gmra.mrb[0].mxu0 %v82
    %v228 = vpop.f32.mrb[0].mxu0
    %v229 = vadd.f32 0.0, %v228
    %v230 = vpop.f32.mrb[0].mxu0
    %231 = vmatprep.mubr.f32.mxu0 0.0
    %232 = vmatmul.mubr.f32.gmra.mrb[0].mxu0 %v87
    %v233 = vpop.f32.mrb[0].mxu0
    %v234 = vadd.f32 0.0, %v233
    %v235 = vpop.f32.mrb[0].mxu0
    %236 = vmatprep.mubr.f32.mxu0 0.0
    %237 = vmatmul.mubr.f32.gmra.mrb[0].mxu0 %v88
    %v238 = vpop.f32.mrb[0].mxu0
    %v239 = vadd.f32 0.0, %v238
    %v240 = vpop.f32.mrb[0].mxu0
    %241 = vmatprep.mubr.f32.mxu0 0.0
    %242 = vmatmul.mubr.f32.gmra.mrb[0].mxu0 %v89
    %v243 = vpop.f32.mrb[0].mxu0
    %v244 = vadd.f32 0.0, %v243
    %v245 = vpop.f32.mrb[0].mxu0
    %246 = vmatprep.mubr.f32.mxu0 0.0
    %247 = vmatmul.mubr.f32.gmra.mrb[0].mxu0 %v90
    %v248 = vpop.f32.mrb[0].mxu0
    %v249 = vadd.f32 0.0, %v248
    %v250 = vpop.f32.mrb[0].mxu0
    %251 = vmatprep.mubr.f32.mxu0 0.0
    %252 = vmatmul.mubr.f32.gmra.mrb[0].mxu0 %v95
    %v253 = vpop.f32.mrb[0].mxu0
    %v254 = vadd.f32 0.0, %v253
    %v255 = vpop.f32.mrb[0].mxu0
    %256 = vmatprep.mubr.f32.mxu0 0.0
    %257 = vmatmul.mubr.f32.gmra.mrb[0].mxu0 %v96
    %v258 = vpop.f32.mrb[0].mxu0
    %v259 = vadd.f32 0.0, %v258
    %v260 = vpop.f32.mrb[0].mxu0
    %261 = vmatprep.mubr.f32.mxu0 0.0
    %262 = vmatmul.mubr.f32.gmra.mrb[0].mxu0 %v97
    %v263 = vpop.f32.mrb[0].mxu0
    %v264 = vadd.f32 0.0, %v263
    %v265 = vpop.f32.mrb[0].mxu0
    %266 = vmatprep.mubr.f32.mxu0 0.0
    %267 = vmatmul.mubr.f32.gmra.mrb[0].mxu0 %v98
    %v268 = vpop.f32.mrb[0].mxu0
    %v269 = vadd.f32 0.0, %v268
    %v270 = vpop.f32.mrb[0].mxu0
    %271 = vmatprep.mubr.f32.mxu0 0.0
    %272 = vmatmul.mubr.f32.gmra.mrb[0].mxu0 %v103
    %v273 = vpop.f32.mrb[0].mxu0
    %v274 = vadd.f32 0.0, %v273
    %v275 = vpop.f32.mrb[0].mxu0
    %276 = vmatprep.mubr.f32.mxu0 0.0
    %277 = vmatmul.mubr.f32.gmra.mrb[0].mxu0 %v104
    %v278 = vpop.f32.mrb[0].mxu0
    %v279 = vadd.f32 0.0, %v278
    %v280 = vpop.f32.mrb[0].mxu0
    %281 = vmatprep.mubr.f32.mxu0 0.0
    %282 = vmatmul.mubr.f32.gmra.mrb[0].mxu0 %v105
    %v283 = vpop.f32.mrb[0].mxu0
    %v284 = vadd.f32 0.0, %v283
    %v285 = vpop.f32.mrb[0].mxu0
    %286 = vmatprep.mubr.f32.mxu0 0.0
    %287 = vmatmul.mubr.f32.gmra.mrb[0].mxu0 %v106
    %v288 = vpop.f32.mrb[0].mxu0
    %v289 = vadd.f32 0.0, %v288
    %v290 = vpop.f32.mrb[0].mxu0
    %291 = vdwg.mxu0
    %v292 = vadd.f32 %v107, %v194
    %v293 = vadd.f32 %v108, %v199
    %v294 = vadd.f32 %v109, %v204
    %v295 = vadd.f32 %v110, %v209
    %v296 = vadd.f32 %v111, %v214
    %v297 = vadd.f32 %v112, %v219
    %v298 = vadd.f32 %v113, %v224
    %v299 = vadd.f32 %v114, %v229
    %v300 = vadd.f32 %v115, %v234
    %v301 = vadd.f32 %v116, %v239
    %v302 = vadd.f32 %v117, %v244
    %v303 = vadd.f32 %v118, %v249
    %v304 = vadd.f32 %v119, %v254
    %v305 = vadd.f32 %v120, %v259
    %v306 = vadd.f32 %v121, %v264
    %v307 = vadd.f32 %v122, %v269
    %v308 = vadd.f32 %v123, %v274
    %v309 = vadd.f32 %v124, %v279
    %v310 = vadd.f32 %v125, %v284
    %v311 = vadd.f32 %v126, %v289
    %vm312 = vcmask 261120
    %313 = vst.msk [vmem:[#allocation2] sm:$0xff] %vm312, %v292
    %314 = vst.msk [vmem:[#allocation2 + $0x8] sm:$0xff] %vm312, %v293
    %315 = vst.msk [vmem:[#allocation2 + $0x10] sm:$0xff] %vm312, %v294
    %316 = vst.msk [vmem:[#allocation2 + $0x18] sm:$0xff] %vm312, %v295
    %317 = vst.msk [vmem:[#allocation2 + $0x20] sm:$0xff] %vm312, %v296
    %318 = vst.msk [vmem:[#allocation2 + $0x28] sm:$0xff] %vm312, %v297
    %319 = vst.msk [vmem:[#allocation2 + $0x30] sm:$0xff] %vm312, %v298
    %320 = vst.msk [vmem:[#allocation2 + $0x38] sm:$0xff] %vm312, %v299
    %321 = vst.msk [vmem:[#allocation2 + $0x40] sm:$0xff] %vm312, %v300
    %322 = vst.msk [vmem:[#allocation2 + $0x48] sm:$0xff] %vm312, %v301
    %323 = vst.msk [vmem:[#allocation2 + $0x50] sm:$0xff] %vm312, %v302
    %324 = vst.msk [vmem:[#allocation2 + $0x58] sm:$0xff] %vm312, %v303
    %325 = vst.msk [vmem:[#allocation2 + $0x60] sm:$0xff] %vm312, %v304
    %326 = vst.msk [vmem:[#allocation2 + $0x68] sm:$0xff] %vm312, %v305
    %327 = vst.msk [vmem:[#allocation2 + $0x70] sm:$0xff] %vm312, %v306
    %328 = vst.msk [vmem:[#allocation2 + $0x78] sm:$0xff] %vm312, %v307
    %329 = vst.msk [vmem:[#allocation2 + $0x80] sm:$0xff] %vm312, %v308
    %330 = vst.msk [vmem:[#allocation2 + $0x88] sm:$0xff] %vm312, %v309
    %331 = vst.msk [vmem:[#allocation2 + $0x90] sm:$0xff] %vm312, %v310
    %332 = vst.msk [vmem:[#allocation2 + $0x98] sm:$0xff] %vm312, %v311
    // Predicated region
    $region22: #{tpu_custom_call.1} parent=1 // pred_check
      %p333 = pneg %p37
    $region23: #{tpu_custom_call.1} parent=1 // pred_check_branch
      %335 = sbr.rel (%p333) target = $region25
    $region24: #{tpu_custom_call.1} parent=1 // pred_region
      %v336 = vld [vmem:[#allocation2] sm:$0xff]
      %v337 = vld [vmem:[#allocation2 + $0x8] sm:$0xff]
      %v338 = vld [vmem:[#allocation2 + $0x10] sm:$0xff]
      %v339 = vld [vmem:[#allocation2 + $0x18] sm:$0xff]
      %v340 = vld [vmem:[#allocation2 + $0x20] sm:$0xff]
      %v341 = vld [vmem:[#allocation2 + $0x28] sm:$0xff]
      %v342 = vld [vmem:[#allocation2 + $0x30] sm:$0xff]
      %v343 = vld [vmem:[#allocation2 + $0x38] sm:$0xff]
      %v344 = vld [vmem:[#allocation2 + $0x40] sm:$0xff]
      %v345 = vld [vmem:[#allocation2 + $0x48] sm:$0xff]
      %v346 = vld [vmem:[#allocation2 + $0x50] sm:$0xff]
      %v347 = vld [vmem:[#allocation2 + $0x58] sm:$0xff]
      %v348 = vld [vmem:[#allocation2 + $0x60] sm:$0xff]
      %v349 = vld [vmem:[#allocation2 + $0x68] sm:$0xff]
      %v350 = vld [vmem:[#allocation2 + $0x70] sm:$0xff]
      %v351 = vld [vmem:[#allocation2 + $0x78] sm:$0xff]
      %v352 = vld [vmem:[#allocation2 + $0x80] sm:$0xff]
      %v353 = vld [vmem:[#allocation2 + $0x88] sm:$0xff]
      %v354 = vld [vmem:[#allocation2 + $0x90] sm:$0xff]
      %v355 = vld [vmem:[#allocation2 + $0x98] sm:$0xff]
      %356 = vst.msk [vmem:[%s2] sm:$0xff] %vm312, %v336
      %357 = vst.msk [vmem:[%s2 + $0x8] sm:$0xff] %vm312, %v337
      %358 = vst.msk [vmem:[%s2 + $0x10] sm:$0xff] %vm312, %v338
      %359 = vst.msk [vmem:[%s2 + $0x18] sm:$0xff] %vm312, %v339
      %360 = vst.msk [vmem:[%s2 + $0x20] sm:$0xff] %vm312, %v340
      %361 = vst.msk [vmem:[%s2 + $0x28] sm:$0xff] %vm312, %v341
      %362 = vst.msk [vmem:[%s2 + $0x30] sm:$0xff] %vm312, %v342
      %363 = vst.msk [vmem:[%s2 + $0x38] sm:$0xff] %vm312, %v343
      %364 = vst.msk [vmem:[%s2 + $0x40] sm:$0xff] %vm312, %v344
      %365 = vst.msk [vmem:[%s2 + $0x48] sm:$0xff] %vm312, %v345
      %366 = vst.msk [vmem:[%s2 + $0x50] sm:$0xff] %vm312, %v346
      %367 = vst.msk [vmem:[%s2 + $0x58] sm:$0xff] %vm312, %v347
      %368 = vst.msk [vmem:[%s2 + $0x60] sm:$0xff] %vm312, %v348
      %369 = vst.msk [vmem:[%s2 + $0x68] sm:$0xff] %vm312, %v349
      %370 = vst.msk [vmem:[%s2 + $0x70] sm:$0xff] %vm312, %v350
      %371 = vst.msk [vmem:[%s2 + $0x78] sm:$0xff] %vm312, %v351
      %372 = vst.msk [vmem:[%s2 + $0x80] sm:$0xff] %vm312, %v352
      %373 = vst.msk [vmem:[%s2 + $0x88] sm:$0xff] %vm312, %v353
      %374 = vst.msk [vmem:[%s2 + $0x90] sm:$0xff] %vm312, %v354
      %375 = vst.msk [vmem:[%s2 + $0x98] sm:$0xff] %vm312, %v355
    $region25: #{tpu_custom_call.1} parent=1 // pred_fallthru
      _
    // Predicated region
    $region26: #{tpu_custom_call.1} parent=1 // pred_check
      _
    $region27: #{tpu_custom_call.1} parent=1 // pred_check_branch
      %377 = sbr.rel (0) target = $region29
    $region28: #{tpu_custom_call.1} parent=1 // pred_region
      _
    $region29: #{tpu_custom_call.1} parent=1 // pred_fallthru
      _
    // Predicated region
    $region30: #{tpu_custom_call.1} parent=1 // pred_check
      _
    $region31: #{tpu_custom_call.1} parent=1 // pred_check_branch
      %379 = sbr.rel (0) target = $region33
    $region32: #{tpu_custom_call.1} parent=1 // pred_region
      _
    $region33: #{tpu_custom_call.1} parent=1 // pred_fallthru
      _
    %380 = vsyncpa [#allocation4], 1
    %381 = vsyncpa [#allocation6], 1

</llo_original>
